<compile_context>
chip_gen: v5e
topology: v5e:2x2
jax: 0.10.0
libtpu: 0.0.40
codegen_flags: <defaults>
</compile_context>

<pallas_src>
import functools

import jax
import jax.numpy as jnp
from jax.experimental import pallas as pl
from jax.experimental.pallas import tpu as pltpu


def _round_up(n: int, m: int) -> int:
    return ((n + m - 1) // m) * m


def seg_head_kernel(x_ref, w_ref, b_ref, o_ref):
    # x_ref: (TB, D)  w_ref: (D, C)  b_ref: (1, C)  o_ref: (TB, C)
    logits = jnp.dot(x_ref[...], w_ref[...],
                     preferred_element_type=jnp.float32) + b_ref[...]
    # Numerically stable softmax over the class axis (PyTorch dim=1).
    m = jnp.max(logits, axis=-1, keepdims=True)
    e = jnp.exp(logits - m)
    denom = jnp.sum(e, axis=-1, keepdims=True)
    # Exact division: rows sum to 1 to float32 rounding (the approx EUP
    # reciprocal was the source of the previous correctness failure).
    o_ref[...] = (e / denom).astype(o_ref.dtype)


def _choose_batch_tile(B: int, D: int, C: int) -> int:
    """Batch tile from a VMEM budget safe on every generation.

    Budget: 2*TB*D*4 (x, double-buffered) + 2*TB*C*4 (out, double-buffered)
            + 2*(D*C + C)*4 (resident w/b, charged at default double buffering)
            <= 12 MiB  (fits v5e's 16 MiB default scoped VMEM; tiny vs v6e/v7x).
    """
    vmem_budget = 12 * 1024 * 1024
    resident = 2 * (D * C + C) * 4
    per_row = 2 * (D + C) * 4
    tb = max(8, ((vmem_budget - resident) // per_row) // 8 * 8)
    tb = min(tb, 8192)  # already >= a few MiB per step; diminishing returns
    if B >= 16:
        # Keep >= 2 grid steps so the "parallel" axis shards over both v7x TCs.
        tb = min(tb, _round_up(-(-B // 2), 8))
    if tb >= B:
        tb = B  # one full block; block dim == full array dim is always legal
    return tb
    # TODO(synk): for D*C so large that even TB=8 + resident weights exceed
    # VMEM, add a K ("arbitrary", last) grid axis with an f32 accumulator.


@jax.jit
def segmentation_head(x, w, b):
    """x: (B, D), w: (D, C), b: (C,)  ->  (B, C) softmax probabilities."""
    B, D = x.shape
    C = w.shape[1]

    TB = _choose_batch_tile(B, D, C)
    grid = (pl.cdiv(B, TB),)

    w_p = w.astype(jnp.float32)
    b_p = b.astype(jnp.float32).reshape(1, C)

    vmem_needed = 2 * TB * (D + C) * 4 + 2 * (D * C + C) * 4
    vmem_limit = min(64 * 1024 * 1024,
                     max(16 * 1024 * 1024, (vmem_needed * 5) // 4 + (1 << 20)))

    cost = pl.CostEstimate(
        flops=2 * B * D * C,
        transcendentals=B * C,
        bytes_accessed=B * D * 4 + D * C * 4 + C * 4 + B * C * 4,
    )

    out = pl.pallas_call(
        seg_head_kernel,
        out_shape=jax.ShapeDtypeStruct((B, C), x.dtype),
        grid=grid,
        in_specs=[
            pl.BlockSpec((TB, D), lambda i: (i, 0)),   # x tile (pipelined)
            pl.BlockSpec((D, C), lambda i: (0, 0)),    # weights resident
            pl.BlockSpec((1, C), lambda i: (0, 0)),    # bias resident
        ],
        out_specs=pl.BlockSpec((TB, C), lambda i: (i, 0)),
        compiler_params=pltpu.CompilerParams(
            dimension_semantics=("parallel",),         # megacore on v7x
            vmem_limit_bytes=int(vmem_limit)),
        cost_estimate=cost,
    )(x, w_p, b_p)
    return out


if __name__ == "__main__":
    # small shapes consistent with the module: batch=8, input_size=32, classes=4
    B, D, C = 8, 32, 4
    key = jax.random.PRNGKey(0)
    kx, kw, kb = jax.random.split(key, 3)

    x = jax.random.normal(kx, (B, D), dtype=jnp.float32)
    # deterministic PyTorch-like init: U(-1/sqrt(D), 1/sqrt(D))
    bound = 1.0 / (D ** 0.5)
    w = jax.random.uniform(kw, (D, C), minval=-bound, maxval=bound,
                           dtype=jnp.float32)
    b = jax.random.uniform(kb, (C,), minval=-bound, maxval=bound,
                           dtype=jnp.float32)

    out = segmentation_head(x, w, b)
    jax.block_until_ready(out)

    # reference check in plain JAX
    ref = jax.nn.softmax(x @ w + b, axis=1)
    assert out.shape == (B, C)
    assert jnp.allclose(out, ref, atol=2e-3, rtol=2e-3)
    assert jnp.allclose(jnp.sum(out, axis=1), jnp.ones((B,)), atol=1e-4)

    print("KERNEL_OK")
</pallas_src>

<mosaic_0001>
module attributes {stable_mosaic.version = 11 : i64} {
  func.func @seg_head_kernel(%arg0: i32, %arg1: memref<8x32xf32, #tpu.memory_space<vmem>>, %arg2: memref<32x4xf32, #tpu.memory_space<vmem>>, %arg3: memref<1x4xf32, #tpu.memory_space<vmem>>, %arg4: memref<8x4xf32, #tpu.memory_space<vmem>>) attributes {dimension_semantics = [#tpu.dimension_semantics<parallel>], iteration_bounds = array<i64: 1>, scalar_prefetch = 0 : i64, scratch_operands = 0 : i64, tpu.core_type = #tpu.core_type<tc>, window_params = [{transform_indices = @transform_0, window_bounds = array<i64: 8, 32>}, {pipeline_mode = #tpu.pipeline_mode<synchronous>, transform_indices = @transform_1, window_bounds = array<i64: 32, 4>}, {pipeline_mode = #tpu.pipeline_mode<synchronous>, transform_indices = @transform_2, window_bounds = array<i64: 1, 4>}, {transform_indices = @transform_3, window_bounds = array<i64: 8, 4>}]} {
    %c0 = arith.constant 0 : index
    %c0_0 = arith.constant 0 : index
    %0 = vector.load %arg1[%c0, %c0_0] : memref<8x32xf32, #tpu.memory_space<vmem>>, vector<8x32xf32>
    %c0_1 = arith.constant 0 : index
    %c0_2 = arith.constant 0 : index
    %1 = vector.load %arg2[%c0_1, %c0_2] : memref<32x4xf32, #tpu.memory_space<vmem>>, vector<32x4xf32>
    %cst = arith.constant dense<0.000000e+00> : vector<8x4xf32>
    %2 = tpu.matmul %0, %1, %cst {dimension_numbers = #tpu.dot_dimension_numbers<[1], [0], [0], [1], [0, 0, 1, 1], [], []>} : vector<8x32xf32>, vector<32x4xf32>, vector<8x4xf32> -> vector<8x4xf32>
    %c0_3 = arith.constant 0 : index
    %c0_4 = arith.constant 0 : index
    %3 = vector.load %arg3[%c0_3, %c0_4] : memref<1x4xf32, #tpu.memory_space<vmem>>, vector<1x4xf32>
    %4 = vector.broadcast %3 : vector<1x4xf32> to vector<8x4xf32>
    %5 = arith.addf %2, %4 : vector<8x4xf32>
    %cst_5 = arith.constant dense<0xFF800000> : vector<8xf32>
    %6 = vector.multi_reduction <maximumf>, %5, %cst_5 [1] : vector<8x4xf32> to vector<8xf32>
    %7 = vector.shape_cast %6 : vector<8xf32> to vector<8x1xf32>
    %8 = vector.broadcast %7 : vector<8x1xf32> to vector<8x4xf32>
    %9 = arith.subf %5, %8 : vector<8x4xf32>
    %10 = math.exp %9 : vector<8x4xf32>
    %cst_6 = arith.constant dense<0.000000e+00> : vector<8xf32>
    %11 = vector.multi_reduction <add>, %10, %cst_6 [1] : vector<8x4xf32> to vector<8xf32>
    %12 = vector.shape_cast %11 : vector<8xf32> to vector<8x1xf32>
    %13 = vector.broadcast %12 : vector<8x1xf32> to vector<8x4xf32>
    %14 = arith.divf %10, %13 : vector<8x4xf32>
    %c0_7 = arith.constant 0 : index
    %c0_8 = arith.constant 0 : index
    %15 = vector.load %arg4[%c0_7, %c0_8] : memref<8x4xf32, #tpu.memory_space<vmem>>, vector<8x4xf32>
    tpu.vector_store %arg4[%c0_7, %c0_8], %14 {strides = array<i32>} : memref<8x4xf32, #tpu.memory_space<vmem>>, vector<8x4xf32>,
    return
  }
  func.func @transform_0(%arg0: i32) -> (i32, i32) {
    %c0_i32 = arith.constant 0 : i32
    %c0_i32_0 = arith.constant 0 : i32
    return %arg0, %c0_i32 : i32, i32
  }
  func.func @transform_1(%arg0: i32) -> (i32, i32) {
    %c0_i32 = arith.constant 0 : i32
    %c0_i32_0 = arith.constant 0 : i32
    %c0_i32_1 = arith.constant 0 : i32
    return %c0_i32, %c0_i32_0 : i32, i32
  }
  func.func @transform_2(%arg0: i32) -> (i32, i32) {
    %c0_i32 = arith.constant 0 : i32
    %c0_i32_0 = arith.constant 0 : i32
    %c0_i32_1 = arith.constant 0 : i32
    return %c0_i32, %c0_i32_0 : i32, i32
  }
  func.func @transform_3(%arg0: i32) -> (i32, i32) {
    %c0_i32 = arith.constant 0 : i32
    %c0_i32_0 = arith.constant 0 : i32
    return %arg0, %c0_i32 : i32, i32
  }
}

</mosaic_0001>

<llo_original>
// kernel: segmentation_head.1
$region0: #{segmentation_head.1}
  #allocation0 [shape = 'u32[]', space=smem, size = 0x4, offset = 0x4, fixed_abs, tag = 'smem constant byte address 0x4 - core index']
  #allocation1 [shape = 'u32[72,128]{1,0:T(1,128)}', space=vmem, size = 0x9000, scoped, tag = 'internal scratch']
  %s0 = inlined_call_operand.vmem [shape: f32[8,32], index: 0, kind: input, shape index: {}]
  %s1 = inlined_call_operand.vmem [shape: f32[32,4], index: 1, kind: input, shape index: {}]
  %s2 = inlined_call_operand.vmem [shape: f32[1,4], index: 2, kind: input, shape index: {}]
  %s3 = inlined_call_operand.vmem [shape: f32[8,4], index: 3, kind: output, shape index: {}]
  %s4 = sld [smem:[#allocation0]]
  $region22: #{segmentation_head.1} parent=0
    _
  %s6 = ssub.s32 1, %s4
  %s7 = scalar_select 0, %s6, %s4
  // Predicated region
  $region2: #{segmentation_head.1} parent=0 // pred_check
    _
  $region3: #{segmentation_head.1} parent=0 // pred_check_branch
    %9 = sbr.rel (0) target = $region5
  $region4: #{segmentation_head.1} parent=0 // pred_region
    _
  $region5: #{segmentation_head.1} parent=0 // pred_fallthru
    _
  // Predicated region
  $region6: #{segmentation_head.1} parent=0 // pred_check
    _
  $region7: #{segmentation_head.1} parent=0 // pred_check_branch
    %11 = sbr.rel (0) target = $region9
  $region8: #{segmentation_head.1} parent=0 // pred_region
    _
  $region9: #{segmentation_head.1} parent=0 // pred_fallthru
    _
  // Predicated region
  $region10: #{segmentation_head.1} parent=0 // pred_check
    _
  $region11: #{segmentation_head.1} parent=0 // pred_check_branch
    %13 = sbr.rel (0) target = $region13
  $region12: #{segmentation_head.1} parent=0 // pred_region
    _
  $region13: #{segmentation_head.1} parent=0 // pred_fallthru
    _
  %v14 = vld [vmem:[%s0] sm:$0xff]
  %v15 = vld [vmem:[%s1] sm:$0xff]
  %v16 = vld [vmem:[%s1 + $0x8] sm:$0xff]
  %v17 = vld [vmem:[%s1 + $0x10] sm:$0xff]
  %v18 = vld [vmem:[%s1 + $0x18] sm:$0xff]
  %v19 = vld [vmem:[%s2] sm:$0x1]
  %v21 = vperm.slane %v19, 0
  %vm23 = vcmask 261120
  %v25 = vsel %vm23, %v14, 0
  %27 = vmatpush.msra.mxu0 0.0
  %28 = vmatpush.msra.mxu0 0.0
  %29 = vmatpush.msra.mxu0 0.0
  %30 = vmatpush.msra.mxu0 0.0
  %31 = vmatpush.msra.mxu0 0.0
  %32 = vmatpush.msra.mxu0 0.0
  %33 = vmatpush.msra.mxu0 0.0
  %34 = vmatpush.msra.mxu0 0.0
  %35 = vmatpush.msra.mxu0 0.0
  %36 = vmatpush.msra.mxu0 0.0
  %37 = vmatpush.msra.mxu0 0.0
  %38 = vmatpush.msra.mxu0 0.0
  %39 = vmatpush.msra.mxu0 %v18
  %40 = vmatpush.msra.mxu0 %v17
  %41 = vmatpush.msra.mxu0 %v16
  %42 = vmatpush.msra.mxu0 %v15
  %43 = vmatmul.f32.gmra.mxu0 %v25
  %v44 = vpop.f32.mrf.mxu0
  %v45 = vadd.f32 %v21, %v44
  %46 = vdwg.mxu0
  %vm47 = vcmask 31744
  %v48 = vsel %vm47, %v45, -inf
  %49 = vmax.xlane.f32.xlu0 %v48
  %v50 = vpop.xlane.xlu0 %49
  %v51 = vsub.f32 %v45, %v50
  %v52 = vmul.f32 %v51, 1.442695
  %v53 = vpow.pop %v52
  %v54 = vsel %vm47, %v53, 0.0
  %55 = vadd.xlane.f32.xlu0 %v54
  %v56 = vpop.xlane.xlu0 %55
  %v57 = vrcp.pop %v56
  %v58 = vmul.f32 %v56, %v57
  %v59 = vsub.f32 1.0, %v58
  %v60 = vmul.f32 %v57, %v59
  %v61 = vadd.f32 %v57, %v60
  %vm62 = vweird.f32 %v56
  %vm63 = vweird.f32 %v57
  %vm64 = vmor %vm62, %vm63
  %v65 = vsel %vm64, %v57, %v61
  %v66 = vand.u32 2147483647, %v56
  %vm67 = vcmp.eq.f32.partialorder %v66, 8.507059e+37
  %v68 = vand.u32 %v56, 2147483648
  %v69 = vor.u32 1.1754944e-38, %v68
  %v70 = vsel %vm67, %v69, %v65
  %v71 = vmul.f32 %v53, %v70
  %72 = vst.msk [vmem:[%s3] sm:$0xff] %vm47, %v71
  // Predicated region
  $region14: #{segmentation_head.1} parent=0 // pred_check
    _
  $region15: #{segmentation_head.1} parent=0 // pred_check_branch
    %74 = sbr.rel (0) target = $region17
  $region16: #{segmentation_head.1} parent=0 // pred_region
    _
  $region17: #{segmentation_head.1} parent=0 // pred_fallthru
    _
  // Predicated region
  $region18: #{segmentation_head.1} parent=0 // pred_check
    _
  $region19: #{segmentation_head.1} parent=0 // pred_check_branch
    %76 = sbr.rel (0) target = $region21
  $region20: #{segmentation_head.1} parent=0 // pred_region
    _
  $region21: #{segmentation_head.1} parent=0 // pred_fallthru
    _

</llo_original>
